<compile_context>
chip_gen: v5e
topology: v5e:2x2
jax: 0.10.0
libtpu: 0.0.40
codegen_flags: <defaults>
</compile_context>

<pallas_src>
import functools

import jax
import jax.numpy as jnp
from jax.experimental import pallas as pl
from jax.experimental.pallas import tpu as pltpu


def _cdiv(a, b):
    return -(-a // b)


def _round_up(v, m):
    return _cdiv(v, m) * m


def _padded_vmem_bytes(shape, dtype):
    """Bytes a block really occupies in VMEM: last two dims tile to (8*(4/itemsize), 128)."""
    itemsize = jnp.dtype(dtype).itemsize
    sublane_tile = 8 * max(1, 4 // itemsize)
    *lead, m, n = shape
    lead_prod = 1
    for d in lead:
        lead_prod *= d
    return lead_prod * _round_up(m, sublane_tile) * _round_up(n, 128) * itemsize


def _pick_batch_block(n, per_image_padded_bytes, target_bytes=2 << 20, max_unroll=32):
    """Batch-block size: ~2 MiB (padding-corrected) of in+out per step, bounded unroll."""
    nb = max(1, min(n, target_bytes // max(per_image_padded_bytes, 1), max_unroll))
    steps = _cdiv(n, nb)
    # v7x shares the ("parallel",) grid axis across 2 TensorCores: when multi-step,
    # prefer an even step count so the last step isn't a single-core straggler.
    # A single step stays a single step (best for single-TC v5e/v6e; not worth splitting).
    if steps > 1 and steps % 2 == 1:
        nb_try = _cdiv(n, steps + 1)
        if nb_try >= 1 and _cdiv(n, nb_try) % 2 == 0:
            nb = nb_try
    return nb


def _shortcut_kernel(x_ref, sel_ref, o_ref, *, pad, c):
    # x_ref:   (nb, C, H*W)
    # sel_ref: (H*W, Ho*Wo)      0/1 selection matrix for the ::2,::2 downsample
    # o_ref:   (nb, C + 2*pad, Ho*Wo)
    nb = x_ref.shape[0]
    howo = o_ref.shape[2]
    sel = sel_ref[...]

    # Channel zero-pad: two disjoint stores on the (non-lane) channel dim.
    if pad > 0:
        zeros = jnp.zeros((nb, pad, howo), dtype=o_ref.dtype)
        o_ref[:, :pad, :] = zeros
        o_ref[:, pad + c:, :] = zeros

    # Stride-2 spatial selection as an MXU matmul per image (nb is a small static
    # constant, <= 32, so this unrolls into independent dot+store pairs).
    for i in range(nb):
        y = jnp.dot(x_ref[i], sel, preferred_element_type=jnp.float32)
        o_ref[i, pad:pad + c, :] = y.astype(o_ref.dtype)


def lambda_layer(x, planes):
    """resnet_small 'option A' shortcut lambda. Input and output are NCHW (PyTorch layout)."""
    n, c, h, w = x.shape
    pad = planes // 4
    c_out = c + 2 * pad
    ho = _cdiv(h, 2)          # ceil(H/2), matches x[:, :, ::2, ::2]
    wo = _cdiv(w, 2)          # ceil(W/2)
    hw, howo = h * w, ho * wo

    # 0/1 selection matrix: sel[h*W + w, oh*Wo + ow] = 1 iff (h, w) == (2*oh, 2*ow).
    src_h = jnp.arange(hw, dtype=jnp.int32) // w
    src_w = jnp.arange(hw, dtype=jnp.int32) % w
    dst_h = jnp.arange(howo, dtype=jnp.int32) // wo
    dst_w = jnp.arange(howo, dtype=jnp.int32) % wo
    sel = ((src_h[:, None] == 2 * dst_h[None, :])
           & (src_w[:, None] == 2 * dst_w[None, :])).astype(x.dtype)

    x_flat = x.reshape(n, c, hw)              # free: contiguous reshape, no transpose

    per_image = (_padded_vmem_bytes((1, c, hw), x.dtype)
                 + _padded_vmem_bytes((1, c_out, howo), x.dtype))
    nb = _pick_batch_block(n, per_image)
    steps = _cdiv(n, nb)

    itemsize = jnp.dtype(x.dtype).itemsize
    cost = pl.CostEstimate(
        flops=2 * n * c * hw * howo,
        transcendentals=0,
        bytes_accessed=(n * c * hw + n * c_out * howo + hw * howo) * itemsize,
    )

    kernel = functools.partial(_shortcut_kernel, pad=pad, c=c)
    out_flat = pl.pallas_call(
        kernel,
        out_shape=jax.ShapeDtypeStruct((n, c_out, howo), x.dtype),
        grid=(steps,),
        in_specs=[
            pl.BlockSpec((nb, c, hw), lambda i: (i, 0, 0)),
            pl.BlockSpec((hw, howo), lambda i: (0, 0)),   # selection matrix, resident
        ],
        out_specs=pl.BlockSpec((nb, c_out, howo), lambda i: (i, 0, 0)),
        compiler_params=pltpu.CompilerParams(dimension_semantics=("parallel",)),
        cost_estimate=cost,
    )(x_flat, sel)

    return out_flat.reshape(n, c_out, ho, wo)  # free: contiguous reshape


if __name__ == "__main__":
    key = jax.random.PRNGKey(0)
    N, C, H, W = 2, 4, 16, 16
    planes = 8                                 # -> pad = planes // 4 = 2, C_out = 8
    x = jax.random.normal(key, (N, C, H, W), dtype=jnp.float32)

    out = jax.block_until_ready(lambda_layer(x, planes))

    # Pure-JAX reference of the same lambda (self-check).
    pad = planes // 4
    ref = jnp.pad(x[:, :, ::2, ::2], ((0, 0), (pad, pad), (0, 0), (0, 0)))
    assert out.shape == ref.shape, (out.shape, ref.shape)
    assert out.dtype == x.dtype
    assert jnp.allclose(out, ref), "mismatch vs reference"

    print("KERNEL_OK")
</pallas_src>

<mosaic_0001>
module attributes {stable_mosaic.version = 11 : i64} {
  func.func @_shortcut_kernel(%arg0: i32, %arg1: memref<2x4x256xf32, #tpu.memory_space<vmem>>, %arg2: memref<256x64xf32, #tpu.memory_space<vmem>>, %arg3: memref<2x8x64xf32, #tpu.memory_space<vmem>>) attributes {dimension_semantics = [#tpu.dimension_semantics<parallel>], iteration_bounds = array<i64: 1>, scalar_prefetch = 0 : i64, scratch_operands = 0 : i64, tpu.core_type = #tpu.core_type<tc>, window_params = [{transform_indices = @transform_0, window_bounds = array<i64: 2, 4, 256>}, {pipeline_mode = #tpu.pipeline_mode<synchronous>, transform_indices = @transform_1, window_bounds = array<i64: 256, 64>}, {transform_indices = @transform_2, window_bounds = array<i64: 2, 8, 64>}]} {
    %c0 = arith.constant 0 : index
    %c0_0 = arith.constant 0 : index
    %0 = vector.load %arg2[%c0, %c0_0] : memref<256x64xf32, #tpu.memory_space<vmem>>, vector<256x64xf32>
    %cst = arith.constant 0.000000e+00 : f32
    %1 = vector.broadcast %cst : f32 to vector<2x2x64xf32>
    %c0_1 = arith.constant 0 : index
    %c0_2 = arith.constant 0 : index
    %c0_3 = arith.constant 0 : index
    %2 = vector.load %arg3[%c0_1, %c0_2, %c0_3] : memref<2x8x64xf32, #tpu.memory_space<vmem>>, vector<2x2x64xf32>
    tpu.vector_store %arg3[%c0_1, %c0_2, %c0_3], %1 {strides = array<i32>} : memref<2x8x64xf32, #tpu.memory_space<vmem>>, vector<2x2x64xf32>,
    %c0_4 = arith.constant 0 : index
    %c6 = arith.constant 6 : index
    %c0_5 = arith.constant 0 : index
    %3 = vector.load %arg3[%c0_4, %c6, %c0_5] : memref<2x8x64xf32, #tpu.memory_space<vmem>>, vector<2x2x64xf32>
    tpu.vector_store %arg3[%c0_4, %c6, %c0_5], %1 {strides = array<i32>} : memref<2x8x64xf32, #tpu.memory_space<vmem>>, vector<2x2x64xf32>,
    %c0_6 = arith.constant 0 : index
    %c0_7 = arith.constant 0 : index
    %c0_8 = arith.constant 0 : index
    %4 = vector.load %arg1[%c0_6, %c0_7, %c0_8] : memref<2x4x256xf32, #tpu.memory_space<vmem>>, vector<1x4x256xf32>
    %5 = vector.shape_cast %4 : vector<1x4x256xf32> to vector<4x256xf32>
    %cst_9 = arith.constant dense<0.000000e+00> : vector<4x64xf32>
    %6 = tpu.matmul %5, %0, %cst_9 {dimension_numbers = #tpu.dot_dimension_numbers<[1], [0], [0], [1], [0, 0, 1, 1], [], []>} : vector<4x256xf32>, vector<256x64xf32>, vector<4x64xf32> -> vector<4x64xf32>
    %c0_10 = arith.constant 0 : index
    %c2 = arith.constant 2 : index
    %c0_11 = arith.constant 0 : index
    %7 = vector.load %arg3[%c0_10, %c2, %c0_11] : memref<2x8x64xf32, #tpu.memory_space<vmem>>, vector<1x4x64xf32>
    %8 = vector.shape_cast %7 : vector<1x4x64xf32> to vector<4x64xf32>
    %9 = vector.shape_cast %6 : vector<4x64xf32> to vector<1x4x64xf32>
    tpu.vector_store %arg3[%c0_10, %c2, %c0_11], %9 {strides = array<i32>} : memref<2x8x64xf32, #tpu.memory_space<vmem>>, vector<1x4x64xf32>,
    %c1 = arith.constant 1 : index
    %c0_12 = arith.constant 0 : index
    %c0_13 = arith.constant 0 : index
    %10 = vector.load %arg1[%c1, %c0_12, %c0_13] : memref<2x4x256xf32, #tpu.memory_space<vmem>>, vector<1x4x256xf32>
    %11 = vector.shape_cast %10 : vector<1x4x256xf32> to vector<4x256xf32>
    %cst_14 = arith.constant dense<0.000000e+00> : vector<4x64xf32>
    %12 = tpu.matmul %11, %0, %cst_14 {dimension_numbers = #tpu.dot_dimension_numbers<[1], [0], [0], [1], [0, 0, 1, 1], [], []>} : vector<4x256xf32>, vector<256x64xf32>, vector<4x64xf32> -> vector<4x64xf32>
    %c1_15 = arith.constant 1 : index
    %c2_16 = arith.constant 2 : index
    %c0_17 = arith.constant 0 : index
    %13 = vector.load %arg3[%c1_15, %c2_16, %c0_17] : memref<2x8x64xf32, #tpu.memory_space<vmem>>, vector<1x4x64xf32>
    %14 = vector.shape_cast %13 : vector<1x4x64xf32> to vector<4x64xf32>
    %15 = vector.shape_cast %12 : vector<4x64xf32> to vector<1x4x64xf32>
    tpu.vector_store %arg3[%c1_15, %c2_16, %c0_17], %15 {strides = array<i32>} : memref<2x8x64xf32, #tpu.memory_space<vmem>>, vector<1x4x64xf32>,
    return
  }
  func.func @transform_0(%arg0: i32) -> (i32, i32, i32) {
    %c0_i32 = arith.constant 0 : i32
    %c0_i32_0 = arith.constant 0 : i32
    %c0_i32_1 = arith.constant 0 : i32
    return %arg0, %c0_i32, %c0_i32_0 : i32, i32, i32
  }
  func.func @transform_1(%arg0: i32) -> (i32, i32) {
    %c0_i32 = arith.constant 0 : i32
    %c0_i32_0 = arith.constant 0 : i32
    %c0_i32_1 = arith.constant 0 : i32
    return %c0_i32, %c0_i32_0 : i32, i32
  }
  func.func @transform_2(%arg0: i32) -> (i32, i32, i32) {
    %c0_i32 = arith.constant 0 : i32
    %c0_i32_0 = arith.constant 0 : i32
    %c0_i32_1 = arith.constant 0 : i32
    return %arg0, %c0_i32, %c0_i32_0 : i32, i32, i32
  }
}

</mosaic_0001>

<llo_original>
// kernel: tpu_custom_call.1
$region0: #{tpu_custom_call.1}
  #allocation0 [shape = 'u32[]', space=smem, size = 0x4, offset = 0x4, fixed_abs, tag = 'smem constant byte address 0x4 - core index']
  #allocation1 [shape = 'u32[72,128]{1,0:T(1,128)}', space=vmem, size = 0x9000, scoped, tag = 'internal scratch']
  %s0 = inlined_call_operand.vmem [shape: f32[2,4,256], index: 0, kind: input, shape index: {}]
  %s1 = inlined_call_operand.vmem [shape: f32[256,64], index: 1, kind: input, shape index: {}]
  %s2 = inlined_call_operand.hbm [shape: f32[2,8,64], index: 2, kind: output, shape index: {}]
  %s3 = sld [smem:[#allocation0]]
  $region18: #{tpu_custom_call.1} parent=0
    _
  %s5 = ssub.s32 1, %s3
  %s6 = scalar_select 0, %s5, %s3
  $region1: #{tpu_custom_call.1} parent=0
    #allocation2 [shape = 'u8[8192]{0}', space=vmem, size = 0x2000, scoped, tag = 'output window, operand 0, single buffered']
    #allocation3 [shape = 's32[1]{0}', space=sflag, size = 0x4, scoped, tag = 'scoped memory for tpu_custom_call.1']
    %7 = vsyncpa [#allocation3], 0
    // Predicated region
    $region2: #{tpu_custom_call.1} parent=1 // pred_check
      _
    $region3: #{tpu_custom_call.1} parent=1 // pred_check_branch
      %9 = sbr.rel (0) target = $region5
    $region4: #{tpu_custom_call.1} parent=1 // pred_region
      _
    $region5: #{tpu_custom_call.1} parent=1 // pred_fallthru
      _
    // Predicated region
    $region6: #{tpu_custom_call.1} parent=1 // pred_check
      _
    $region7: #{tpu_custom_call.1} parent=1 // pred_check_branch
      %11 = sbr.rel (0) target = $region9
    $region8: #{tpu_custom_call.1} parent=1 // pred_region
      _
    $region9: #{tpu_custom_call.1} parent=1 // pred_fallthru
      _
    %v12 = vld [vmem:[%s1] sm:$0xff]
    %v13 = vld [vmem:[%s1 + $0x8] sm:$0xff]
    %v14 = vld [vmem:[%s1 + $0x10] sm:$0xff]
    %v15 = vld [vmem:[%s1 + $0x18] sm:$0xff]
    %v16 = vld [vmem:[%s1 + $0x20] sm:$0xff]
    %v17 = vld [vmem:[%s1 + $0x28] sm:$0xff]
    %v18 = vld [vmem:[%s1 + $0x30] sm:$0xff]
    %v19 = vld [vmem:[%s1 + $0x38] sm:$0xff]
    %v20 = vld [vmem:[%s1 + $0x40] sm:$0xff]
    %v21 = vld [vmem:[%s1 + $0x48] sm:$0xff]
    %v22 = vld [vmem:[%s1 + $0x50] sm:$0xff]
    %v23 = vld [vmem:[%s1 + $0x58] sm:$0xff]
    %v24 = vld [vmem:[%s1 + $0x60] sm:$0xff]
    %v25 = vld [vmem:[%s1 + $0x68] sm:$0xff]
    %v26 = vld [vmem:[%s1 + $0x70] sm:$0xff]
    %v27 = vld [vmem:[%s1 + $0x78] sm:$0xff]
    %v28 = vld [vmem:[%s1 + $0x80] sm:$0xff]
    %v29 = vld [vmem:[%s1 + $0x88] sm:$0xff]
    %v30 = vld [vmem:[%s1 + $0x90] sm:$0xff]
    %v31 = vld [vmem:[%s1 + $0x98] sm:$0xff]
    %v32 = vld [vmem:[%s1 + $0xa0] sm:$0xff]
    %v33 = vld [vmem:[%s1 + $0xa8] sm:$0xff]
    %v34 = vld [vmem:[%s1 + $0xb0] sm:$0xff]
    %v35 = vld [vmem:[%s1 + $0xb8] sm:$0xff]
    %v36 = vld [vmem:[%s1 + $0xc0] sm:$0xff]
    %v37 = vld [vmem:[%s1 + $0xc8] sm:$0xff]
    %v38 = vld [vmem:[%s1 + $0xd0] sm:$0xff]
    %v39 = vld [vmem:[%s1 + $0xd8] sm:$0xff]
    %v40 = vld [vmem:[%s1 + $0xe0] sm:$0xff]
    %v41 = vld [vmem:[%s1 + $0xe8] sm:$0xff]
    %v42 = vld [vmem:[%s1 + $0xf0] sm:$0xff]
    %v43 = vld [vmem:[%s1 + $0xf8] sm:$0xff]
    %vm44 = vcmask 517120
    %45 = vst.msk [vmem:[#allocation2] sm:$0x3] %vm44, 0.0
    %46 = vst.msk [vmem:[#allocation2 + $0x8] sm:$0x3] %vm44, 0.0
    %47 = vst.msk [vmem:[#allocation2 + $0x6] sm:$0x3] %vm44, 0.0
    %48 = vst.msk [vmem:[#allocation2 + $0xe] sm:$0x3] %vm44, 0.0
    %v49 = vld [vmem:[%s0] sm:$0xff]
    %51 = vst [vmem:[#allocation1] ss:$2 sm:$0xff] %v49
    %v52 = vld.sshfl [vmem:[#allocation1] sm:$0xff pattern:$0x75316420]
    %v53 = vld.sshfl [vmem:[#allocation1 + $0x8] sm:$0xff pattern:$0x75316420]
    %56 = vmatpush.msra.mxu0 %v27
    %57 = vmatpush.msra.mxu0 %v26
    %58 = vmatpush.msra.mxu0 %v25
    %59 = vmatpush.msra.mxu0 %v24
    %60 = vmatpush.msra.mxu0 %v23
    %61 = vmatpush.msra.mxu0 %v22
    %62 = vmatpush.msra.mxu0 %v21
    %63 = vmatpush.msra.mxu0 %v20
    %64 = vmatpush.msra.mxu0 %v19
    %65 = vmatpush.msra.mxu0 %v18
    %66 = vmatpush.msra.mxu0 %v17
    %67 = vmatpush.msra.mxu0 %v16
    %68 = vmatpush.msra.mxu0 %v15
    %69 = vmatpush.msra.mxu0 %v14
    %70 = vmatpush.msra.mxu0 %v13
    %71 = vmatpush.msra.mxu0 %v12
    %72 = vmatmul.f32.gmra.mxu0 %v52
    %v73 = vpop.f32.mrf.mxu0
    %v74 = vadd.f32 0.0, %v73
    %75 = vdwg.mxu0
    %76 = vmatpush.msra.mxu0 %v43
    %77 = vmatpush.msra.mxu0 %v42
    %78 = vmatpush.msra.mxu0 %v41
    %79 = vmatpush.msra.mxu0 %v40
    %80 = vmatpush.msra.mxu0 %v39
    %81 = vmatpush.msra.mxu0 %v38
    %82 = vmatpush.msra.mxu0 %v37
    %83 = vmatpush.msra.mxu0 %v36
    %84 = vmatpush.msra.mxu0 %v35
    %85 = vmatpush.msra.mxu0 %v34
    %86 = vmatpush.msra.mxu0 %v33
    %87 = vmatpush.msra.mxu0 %v32
    %88 = vmatpush.msra.mxu0 %v31
    %89 = vmatpush.msra.mxu0 %v30
    %90 = vmatpush.msra.mxu0 %v29
    %91 = vmatpush.msra.mxu0 %v28
    %92 = vmatmul.f32.gmra.mxu0 %v53
    %v93 = vpop.f32.mrf.mxu0
    %v94 = vadd.f32 %v74, %v93
    %95 = vdwg.mxu0
    %vm96 = vcmask 519168
    %97 = vst.msk [vmem:[#allocation2 + $0x2] sm:$0xf] %vm96, %v94
    %s98 = scalar_lea.vmem %s0, 8
    %v99 = vld [vmem:[%s98] sm:$0xff]
    %101 = vst [vmem:[#allocation1] ss:$2 sm:$0xff] %v99
    %v102 = vld.sshfl [vmem:[#allocation1] sm:$0xff pattern:$0x75316420]
    %v103 = vld.sshfl [vmem:[#allocation1 + $0x8] sm:$0xff pattern:$0x75316420]
    %106 = vmatpush.msra.mxu0 %v27
    %107 = vmatpush.msra.mxu0 %v26
    %108 = vmatpush.msra.mxu0 %v25
    %109 = vmatpush.msra.mxu0 %v24
    %110 = vmatpush.msra.mxu0 %v23
    %111 = vmatpush.msra.mxu0 %v22
    %112 = vmatpush.msra.mxu0 %v21
    %113 = vmatpush.msra.mxu0 %v20
    %114 = vmatpush.msra.mxu0 %v19
    %115 = vmatpush.msra.mxu0 %v18
    %116 = vmatpush.msra.mxu0 %v17
    %117 = vmatpush.msra.mxu0 %v16
    %118 = vmatpush.msra.mxu0 %v15
    %119 = vmatpush.msra.mxu0 %v14
    %120 = vmatpush.msra.mxu0 %v13
    %121 = vmatpush.msra.mxu0 %v12
    %122 = vmatmul.f32.gmra.mxu0 %v102
    %v123 = vpop.f32.mrf.mxu0
    %v124 = vadd.f32 0.0, %v123
    %125 = vdwg.mxu0
    %126 = vmatpush.msra.mxu0 %v43
    %127 = vmatpush.msra.mxu0 %v42
    %128 = vmatpush.msra.mxu0 %v41
    %129 = vmatpush.msra.mxu0 %v40
    %130 = vmatpush.msra.mxu0 %v39
    %131 = vmatpush.msra.mxu0 %v38
    %132 = vmatpush.msra.mxu0 %v37
    %133 = vmatpush.msra.mxu0 %v36
    %134 = vmatpush.msra.mxu0 %v35
    %135 = vmatpush.msra.mxu0 %v34
    %136 = vmatpush.msra.mxu0 %v33
    %137 = vmatpush.msra.mxu0 %v32
    %138 = vmatpush.msra.mxu0 %v31
    %139 = vmatpush.msra.mxu0 %v30
    %140 = vmatpush.msra.mxu0 %v29
    %141 = vmatpush.msra.mxu0 %v28
    %142 = vmatmul.f32.gmra.mxu0 %v103
    %v143 = vpop.f32.mrf.mxu0
    %v144 = vadd.f32 %v124, %v143
    %145 = vdwg.mxu0
    %s146 = scalar_lea.vmem [#allocation2], 8
    %147 = vst.msk [vmem:[%s146 + $0x2] sm:$0xf] %vm96, %v144
    // Predicated region
    $region10: #{tpu_custom_call.1} parent=1 // pred_check
      _
    $region11: #{tpu_custom_call.1} parent=1 // pred_check_branch
      %149 = sbr.rel (0) target = $region13
    $region12: #{tpu_custom_call.1} parent=1 // pred_region
      %151 = vsyncadd [#allocation3], 0
      %s152 = sshll.u32 [#allocation2], 4
      %s153 = int_to_ptr.vmem [resolvable:$true] %s152
      %s154 = sshll.u32 %s2, 4
      %s155 = int_to_ptr.hbm [resolvable:$true] %s154
      %160 = dma.vmem_to_hbm [thread:$0]  %s153, 256, %s155, [#allocation3], 128, 128, 8
    $region13: #{tpu_custom_call.1} parent=1 // pred_fallthru
      _
    // Predicated region
    $region14: #{tpu_custom_call.1} parent=1 // pred_check
      _
    $region15: #{tpu_custom_call.1} parent=1 // pred_check_branch
      %162 = sbr.rel (0) target = $region17
    $region16: #{tpu_custom_call.1} parent=1 // pred_region
      %164 = dma.done [#allocation3], 256
    $region17: #{tpu_custom_call.1} parent=1 // pred_fallthru
      _
    %165 = vsyncpa [#allocation3], 1

</llo_original>
